<compile_context>
chip_gen: v5e
topology: v5e:2x2
jax: 0.10.0
libtpu: 0.0.40
codegen_flags: <defaults>
</compile_context>

<pallas_src>
import jax
import jax.numpy as jnp
from jax.experimental import pallas as pl
from jax.experimental.pallas import tpu as pltpu

_BN_EPS = 1e-5
_ELU_ALPHA = 1.0


# ---------------------------------------------------------------------------
# Pass 1: masked per-channel sum / sum-of-squares of y = W @ x.
# Grid = (num_m_tiles, B); accumulator outputs pinned to block (0, 0).
# ---------------------------------------------------------------------------
def _stats_kernel(tl_ref, x_ref, w_ref, tidx_ref, sum_ref, sumsq_ref):
    # tl_ref   : SMEM (B,)            int32 valid lengths along W (scalar prefetch)
    # x_ref    : VMEM (1, Cin, tile)  bf16 activations (NCHW-native slab)
    # w_ref    : VMEM (Cout, Cin)     bf16 1x1 conv weight
    # tidx_ref : VMEM (1, tile)       int32 time index (pos % W), tail padded to W
    # sum_ref / sumsq_ref : VMEM (Cout, 1) f32 accumulators (resident across grid)
    mi = pl.program_id(0)
    b = pl.program_id(1)

    @pl.when((mi == 0) & (b == 0))
    def _init():
        sum_ref[...] = jnp.zeros_like(sum_ref)
        sumsq_ref[...] = jnp.zeros_like(sumsq_ref)

    # 1x1 conv on this tile: bf16 x bf16 -> f32 on the MXU.
    y = jnp.dot(w_ref[...], x_ref[0], preferred_element_type=jnp.float32)

    # Validity mask from the SMEM scalar length; padded tail has tidx == W so it
    # can never compare valid.  jnp.where (select) keeps OOB garbage out.
    valid = tidx_ref[...] < tl_ref[b]                       # (1, tile) bool
    ym = jnp.where(valid, y, 0.0)                           # (Cout, tile)

    sum_ref[...] = sum_ref[...] + jnp.sum(ym, axis=1, keepdims=True)
    sumsq_ref[...] = sumsq_ref[...] + jnp.sum(ym * ym, axis=1, keepdims=True)


# ---------------------------------------------------------------------------
# Pass 2: y = W @ x, then affine BN (precomputed scale/shift) + ELU.
# Grid = (B, num_m_tiles); fully parallel (megacore-shardable).
# ---------------------------------------------------------------------------
def _apply_kernel(x_ref, w_ref, scale_ref, shift_ref, o_ref):
    y = jnp.dot(w_ref[...], x_ref[0], preferred_element_type=jnp.float32)
    z = y * scale_ref[...] + shift_ref[...]                 # (Cout, tile) f32
    elu = jnp.where(z > 0.0, z,
                    _ELU_ALPHA * (jnp.exp(jnp.minimum(z, 0.0)) - 1.0))
    o_ref[0] = elu.astype(o_ref.dtype)


def channel_expansion(x, conv_w, gamma, beta, trial_lengths=None, *,
                      m_tile=4096, stream_dtype=jnp.bfloat16):
    """x: (B, Cin, H, W) f32 NCHW.  conv_w: (Cout, Cin, 1, 1).
    gamma/beta: (Cout,).  trial_lengths: optional (B,) int valid lengths along W.
    Returns (B, Cout, H, W) f32."""
    B, Cin, H, W = x.shape
    Cout = conv_w.shape[0]
    HW = H * W
    assert m_tile % 128 == 0, "m_tile must be a multiple of 128"

    # NCHW-native slab: free reshape, no transposes.  Stream as bf16.
    x3 = x.reshape(B, Cin, HW).astype(stream_dtype)
    w = conv_w.reshape(Cout, Cin).astype(stream_dtype)

    if trial_lengths is None:
        lengths = jnp.full((B,), W, dtype=jnp.int32)
    else:
        lengths = jnp.clip(trial_lengths.astype(jnp.int32), 0, W)

    tile = HW if HW <= m_tile else m_tile        # full (any size) or multiple of 128
    num_mt = pl.cdiv(HW, tile)
    padded = num_mt * tile

    # Shared per-position time index (pos % W); tail padded with W => never valid.
    pos = jnp.arange(padded, dtype=jnp.int32)
    tidx = jnp.where(pos < HW, pos % W, W).reshape(1, padded)

    bpe_in = jnp.dtype(stream_dtype).itemsize

    # ---- pass 1: masked statistics ----------------------------------------
    sums, sumsqs = pl.pallas_call(
        _stats_kernel,
        out_shape=(jax.ShapeDtypeStruct((Cout, 1), jnp.float32),
                   jax.ShapeDtypeStruct((Cout, 1), jnp.float32)),
        grid_spec=pltpu.PrefetchScalarGridSpec(
            num_scalar_prefetch=1,
            grid=(num_mt, B),          # tile outer -> tidx block reused across batch
            in_specs=[
                pl.BlockSpec((1, Cin, tile), lambda mi, b, tl: (b, 0, mi)),
                pl.BlockSpec((Cout, Cin), lambda mi, b, tl: (0, 0)),
                pl.BlockSpec((1, tile), lambda mi, b, tl: (0, mi)),
            ],
            out_specs=[
                pl.BlockSpec((Cout, 1), lambda mi, b, tl: (0, 0)),
                pl.BlockSpec((Cout, 1), lambda mi, b, tl: (0, 0)),
            ],
        ),
        compiler_params=pltpu.CompilerParams(
            dimension_semantics=("arbitrary", "arbitrary")),
        cost_estimate=pl.CostEstimate(
            flops=2 * B * HW * Cin * Cout + 4 * B * HW * Cout,
            transcendentals=0,
            bytes_accessed=B * HW * Cin * bpe_in + padded * 4 + Cout * Cin * bpe_in),
    )(lengths, x3, w, tidx)

    # ---- tiny (Cout-sized) finalize: fold BN stats into scale/shift --------
    count = jnp.maximum(jnp.sum(lengths).astype(jnp.float32) * H, 1.0)
    mean = sums / count
    var = jnp.maximum(sumsqs / count - mean * mean, 0.0)     # biased variance
    inv_std = jax.lax.rsqrt(var + _BN_EPS)
    scale = gamma.reshape(Cout, 1).astype(jnp.float32) * inv_std
    shift = beta.reshape(Cout, 1).astype(jnp.float32) - mean * scale

    # ---- pass 2: normalize + ELU (lane-dense NCHW output) ------------------
    out3 = pl.pallas_call(
        _apply_kernel,
        out_shape=jax.ShapeDtypeStruct((B, Cout, HW), jnp.float32),
        grid_spec=pltpu.PrefetchScalarGridSpec(
            num_scalar_prefetch=0,
            grid=(B, num_mt),
            in_specs=[
                pl.BlockSpec((1, Cin, tile), lambda b, mi: (b, 0, mi)),
                pl.BlockSpec((Cout, Cin), lambda b, mi: (0, 0)),
                pl.BlockSpec((Cout, 1), lambda b, mi: (0, 0)),
                pl.BlockSpec((Cout, 1), lambda b, mi: (0, 0)),
            ],
            out_specs=pl.BlockSpec((1, Cout, tile), lambda b, mi: (b, 0, mi)),
        ),
        compiler_params=pltpu.CompilerParams(
            dimension_semantics=("parallel", "parallel")),
        cost_estimate=pl.CostEstimate(
            flops=2 * B * HW * Cin * Cout + 4 * B * HW * Cout,
            transcendentals=B * HW * Cout,
            bytes_accessed=B * HW * (Cin * bpe_in + Cout * 4)),
    )(x3, w, scale, shift)

    return out3.reshape(B, Cout, H, W)


# ---------------------------------------------------------------------------
# Pure-JAX reference (same bf16-rounded conv inputs, training-mode masked BN).
# ---------------------------------------------------------------------------
def _reference(x, conv_w, gamma, beta, trial_lengths):
    B, Cin, H, W = x.shape
    Cout = conv_w.shape[0]
    xb = x.astype(jnp.bfloat16).astype(jnp.float32)
    wb = conv_w.reshape(Cout, Cin).astype(jnp.bfloat16).astype(jnp.float32)
    y = jnp.einsum("oc,bchw->bohw", wb, xb)
    if trial_lengths is None:
        mask = jnp.ones((B, 1, 1, W), jnp.float32)
    else:
        mask = (jnp.arange(W, dtype=jnp.int32)[None, :]
                < jnp.clip(trial_lengths, 0, W)[:, None]).astype(jnp.float32)
        mask = mask[:, None, None, :]
    count = jnp.maximum(jnp.sum(mask) * H, 1.0)
    mean = jnp.sum(y * mask, axis=(0, 2, 3), keepdims=True) / count
    var = jnp.sum(((y - mean) ** 2) * mask, axis=(0, 2, 3), keepdims=True) / count
    z = (y - mean) * jax.lax.rsqrt(var + _BN_EPS)
    z = z * gamma.reshape(1, Cout, 1, 1) + beta.reshape(1, Cout, 1, 1)
    return jnp.where(z > 0.0, z, _ELU_ALPHA * jnp.expm1(jnp.minimum(z, 0.0)))


if __name__ == "__main__":
    # Small shapes consistent with the module (conv maps n_filters -> ch_dim).
    B, n_filters, ch_dim, H, W = 2, 8, 16, 4, 64

    key = jax.random.PRNGKey(0)
    k_x, k_w, k_g, k_b = jax.random.split(key, 4)

    x = jax.random.normal(k_x, (B, n_filters, H, W), dtype=jnp.float32)
    conv_w = 0.1 * jax.random.normal(k_w, (ch_dim, n_filters, 1, 1), dtype=jnp.float32)
    gamma = 1.0 + 0.05 * jax.random.normal(k_g, (ch_dim,), dtype=jnp.float32)
    beta = 0.05 * jax.random.normal(k_b, (ch_dim,), dtype=jnp.float32)
    trial_lengths = jnp.array([W, W // 2], dtype=jnp.int32)   # ragged valid lengths

    # Masked, multi-tile path (H*W = 256, tile = 128 -> 2 pixel tiles per batch).
    out = channel_expansion(x, conv_w, gamma, beta, trial_lengths, m_tile=128)
    jax.block_until_ready(out)
    assert out.shape == (B, ch_dim, H, W), out.shape
    ref = _reference(x, conv_w, gamma, beta, trial_lengths)
    assert jnp.allclose(out, ref, atol=2e-2, rtol=2e-2), \
        float(jnp.max(jnp.abs(out - ref)))

    # Unmasked, single-tile default path.
    out2 = channel_expansion(x, conv_w, gamma, beta, None)
    jax.block_until_ready(out2)
    assert out2.shape == (B, ch_dim, H, W), out2.shape
    ref2 = _reference(x, conv_w, gamma, beta, None)
    assert jnp.allclose(out2, ref2, atol=2e-2, rtol=2e-2), \
        float(jnp.max(jnp.abs(out2 - ref2)))

    print("KERNEL_OK")
</pallas_src>

<mosaic_0001>
module attributes {stable_mosaic.version = 11 : i64} {
  func.func @_stats_kernel(%arg0: i32, %arg1: i32, %arg2: memref<2xi32, #tpu.memory_space<smem>>, %arg3: memref<1x8x128xbf16, #tpu.memory_space<vmem>>, %arg4: memref<16x8xbf16, #tpu.memory_space<vmem>>, %arg5: memref<1x128xi32, #tpu.memory_space<vmem>>, %arg6: memref<16x1xf32, #tpu.memory_space<vmem>>, %arg7: memref<16x1xf32, #tpu.memory_space<vmem>>) attributes {dimension_semantics = [#tpu.dimension_semantics<arbitrary>, #tpu.dimension_semantics<arbitrary>], iteration_bounds = array<i64: 2, 2>, scalar_prefetch = 1 : i64, scratch_operands = 0 : i64, tpu.core_type = #tpu.core_type<tc>, window_params = [{transform_indices = @transform_0, window_bounds = array<i64: 1, 8, 128>}, {pipeline_mode = #tpu.pipeline_mode<synchronous>, transform_indices = @transform_1, window_bounds = array<i64: 16, 8>}, {transform_indices = @transform_2, window_bounds = array<i64: 1, 128>}, {pipeline_mode = #tpu.pipeline_mode<synchronous>, transform_indices = @transform_3, window_bounds = array<i64: 16, 1>}, {pipeline_mode = #tpu.pipeline_mode<synchronous>, transform_indices = @transform_4, window_bounds = array<i64: 16, 1>}]} {
    %c0_i32 = arith.constant 0 : i32
    %0 = arith.cmpi eq, %arg0, %c0_i32 : i32
    %c0_i32_0 = arith.constant 0 : i32
    %1 = arith.cmpi eq, %arg1, %c0_i32_0 : i32
    %2 = arith.andi %0, %1 : i1
    %3 = arith.extui %2 : i1 to i32
    %c0_i32_1 = arith.constant 0 : i32
    %4 = arith.cmpi ne, %3, %c0_i32_1 : i32
    scf.if %4 {
      %cst_19 = arith.constant 0.000000e+00 : f32
      %29 = vector.broadcast %cst_19 : f32 to vector<16x1xf32>
      %c0_20 = arith.constant 0 : index
      %c0_21 = arith.constant 0 : index
      %30 = vector.load %arg6[%c0_20, %c0_21] : memref<16x1xf32, #tpu.memory_space<vmem>>, vector<16x1xf32>
      tpu.vector_store %arg6[%c0_20, %c0_21], %29 {strides = array<i32>} : memref<16x1xf32, #tpu.memory_space<vmem>>, vector<16x1xf32>,
      %cst_22 = arith.constant 0.000000e+00 : f32
      %31 = vector.broadcast %cst_22 : f32 to vector<16x1xf32>
      %c0_23 = arith.constant 0 : index
      %c0_24 = arith.constant 0 : index
      %32 = vector.load %arg7[%c0_23, %c0_24] : memref<16x1xf32, #tpu.memory_space<vmem>>, vector<16x1xf32>
      tpu.vector_store %arg7[%c0_23, %c0_24], %31 {strides = array<i32>} : memref<16x1xf32, #tpu.memory_space<vmem>>, vector<16x1xf32>,
    } else {
    }
    %c0 = arith.constant 0 : index
    %c0_2 = arith.constant 0 : index
    %5 = vector.load %arg4[%c0, %c0_2] : memref<16x8xbf16, #tpu.memory_space<vmem>>, vector<16x8xbf16>
    %c0_3 = arith.constant 0 : index
    %c0_4 = arith.constant 0 : index
    %c0_5 = arith.constant 0 : index
    %6 = vector.load %arg3[%c0_3, %c0_4, %c0_5] : memref<1x8x128xbf16, #tpu.memory_space<vmem>>, vector<1x8x128xbf16>
    %7 = vector.shape_cast %6 : vector<1x8x128xbf16> to vector<8x128xbf16>
    %cst = arith.constant dense<0.000000e+00> : vector<16x128xf32>
    %8 = tpu.matmul %5, %7, %cst {dimension_numbers = #tpu.dot_dimension_numbers<[1], [0], [0], [1], [0, 0, 1, 1], [], []>} : vector<16x8xbf16>, vector<8x128xbf16>, vector<16x128xf32> -> vector<16x128xf32>
    %c0_6 = arith.constant 0 : index
    %c0_7 = arith.constant 0 : index
    %9 = vector.load %arg5[%c0_6, %c0_7] : memref<1x128xi32, #tpu.memory_space<vmem>>, vector<1x128xi32>
    %10 = arith.index_cast %arg1 : i32 to index
    %11 = memref.load %arg2[%10] : memref<2xi32, #tpu.memory_space<smem>>
    %12 = vector.broadcast %11 : i32 to vector<1x128xi32>
    %13 = arith.cmpi slt, %9, %12 : vector<1x128xi32>
    %cst_8 = arith.constant 0.000000e+00 : f32
    %14 = vector.shape_cast %13 : vector<1x128xi1> to vector<1x128xi1>
    %15 = vector.broadcast %14 : vector<1x128xi1> to vector<16x128xi1>
    %16 = vector.broadcast %cst_8 : f32 to vector<16x128xf32>
    %17 = arith.select %15, %8, %16 : vector<16x128xi1>, vector<16x128xf32>
    %c0_9 = arith.constant 0 : index
    %c0_10 = arith.constant 0 : index
    %18 = vector.load %arg6[%c0_9, %c0_10] : memref<16x1xf32, #tpu.memory_space<vmem>>, vector<16x1xf32>
    %cst_11 = arith.constant dense<0.000000e+00> : vector<16xf32>
    %19 = vector.multi_reduction <add>, %17, %cst_11 [1] : vector<16x128xf32> to vector<16xf32>
    %20 = vector.shape_cast %19 : vector<16xf32> to vector<16x1xf32>
    %21 = arith.addf %18, %20 : vector<16x1xf32>
    %c0_12 = arith.constant 0 : index
    %c0_13 = arith.constant 0 : index
    %22 = vector.load %arg6[%c0_12, %c0_13] : memref<16x1xf32, #tpu.memory_space<vmem>>, vector<16x1xf32>
    tpu.vector_store %arg6[%c0_12, %c0_13], %21 {strides = array<i32>} : memref<16x1xf32, #tpu.memory_space<vmem>>, vector<16x1xf32>,
    %c0_14 = arith.constant 0 : index
    %c0_15 = arith.constant 0 : index
    %23 = vector.load %arg7[%c0_14, %c0_15] : memref<16x1xf32, #tpu.memory_space<vmem>>, vector<16x1xf32>
    %24 = arith.mulf %17, %17 : vector<16x128xf32>
    %cst_16 = arith.constant dense<0.000000e+00> : vector<16xf32>
    %25 = vector.multi_reduction <add>, %24, %cst_16 [1] : vector<16x128xf32> to vector<16xf32>
    %26 = vector.shape_cast %25 : vector<16xf32> to vector<16x1xf32>
    %27 = arith.addf %23, %26 : vector<16x1xf32>
    %c0_17 = arith.constant 0 : index
    %c0_18 = arith.constant 0 : index
    %28 = vector.load %arg7[%c0_17, %c0_18] : memref<16x1xf32, #tpu.memory_space<vmem>>, vector<16x1xf32>
    tpu.vector_store %arg7[%c0_17, %c0_18], %27 {strides = array<i32>} : memref<16x1xf32, #tpu.memory_space<vmem>>, vector<16x1xf32>,
    return
  }
  func.func @transform_0(%arg0: i32, %arg1: i32, %arg2: memref<2xi32, #tpu.memory_space<smem>>) -> (i32, i32, i32) {
    %c0_i32 = arith.constant 0 : i32
    %c0_i32_0 = arith.constant 0 : i32
    return %arg1, %c0_i32, %arg0 : i32, i32, i32
  }
  func.func @transform_1(%arg0: i32, %arg1: i32, %arg2: memref<2xi32, #tpu.memory_space<smem>>) -> (i32, i32) {
    %c0_i32 = arith.constant 0 : i32
    %c0_i32_0 = arith.constant 0 : i32
    %c0_i32_1 = arith.constant 0 : i32
    return %c0_i32, %c0_i32_0 : i32, i32
  }
  func.func @transform_2(%arg0: i32, %arg1: i32, %arg2: memref<2xi32, #tpu.memory_space<smem>>) -> (i32, i32) {
    %c0_i32 = arith.constant 0 : i32
    %c0_i32_0 = arith.constant 0 : i32
    return %c0_i32, %arg0 : i32, i32
  }
  func.func @transform_3(%arg0: i32, %arg1: i32, %arg2: memref<2xi32, #tpu.memory_space<smem>>) -> (i32, i32) {
    %c0_i32 = arith.constant 0 : i32
    %c0_i32_0 = arith.constant 0 : i32
    %c0_i32_1 = arith.constant 0 : i32
    return %c0_i32, %c0_i32_0 : i32, i32
  }
  func.func @transform_4(%arg0: i32, %arg1: i32, %arg2: memref<2xi32, #tpu.memory_space<smem>>) -> (i32, i32) {
    %c0_i32 = arith.constant 0 : i32
    %c0_i32_0 = arith.constant 0 : i32
    %c0_i32_1 = arith.constant 0 : i32
    return %c0_i32, %c0_i32_0 : i32, i32
  }
}

</mosaic_0001>

<llo_original>
// kernel: tpu_custom_call.1
$region0: #{tpu_custom_call.1}
  #allocation0 [shape = 'u32[]', space=smem, size = 0x4, offset = 0x4, fixed_abs, tag = 'smem constant byte address 0x4 - core index']
  #allocation1 [shape = 'u32[72,128]{1,0:T(1,128)}', space=vmem, size = 0x9000, scoped, tag = 'internal scratch']
  #allocation2 [shape = 's32[1]{0}', space=sflag, size = 0x4, scoped, tag = 'scoped memory for tpu_custom_call.1']
  #allocation3 [shape = 'u8[512]{0}', space=smem, size = 0x200, scoped, tag = 'prefetched SMEM operand 0']
  %s0 = inlined_call_operand.vmem [shape: s32[2], index: 0, kind: input, shape index: {}]
  %s1 = inlined_call_operand.hbm [shape: bf16[2,8,256], index: 1, kind: input, shape index: {}]
  %s2 = inlined_call_operand.vmem [shape: bf16[16,8], index: 2, kind: input, shape index: {}]
  %s3 = inlined_call_operand.vmem [shape: s32[1,256], index: 3, kind: input, shape index: {}]
  %s4 = inlined_call_operand.vmem [shape: f32[16,1], index: 4, kind: output, shape index: {0}]
  %s5 = inlined_call_operand.vmem [shape: f32[16,1], index: 5, kind: output, shape index: {1}]
  %6 = xla_tuple %s4, %s5
  %s7 = sld [smem:[#allocation0]]
  $region61: #{tpu_custom_call.1} parent=0
    _
  %s9 = ssub.s32 1, %s7
  %s10 = scalar_select 0, %s9, %s7
  %s12 = sshll.u32 %s0, 4
  %s13 = int_to_ptr.vmem [resolvable:$true] %s12
  %15 = dma.vmem_to_smem %s13, 16, [#allocation3], [#allocation2]
  %17 = dma.done [#allocation2], 16
  %18 = sfence
  $region1: #{tpu_custom_call.1} parent=0
    #allocation4 [shape = 'u8[4096]{0}', space=vmem, size = 0x1000, scoped, tag = 'input window, operand 1']
    #allocation5 [shape = 's32[2]{0}', space=sflag, size = 0x8, scoped, tag = 'scoped memory for tpu_custom_call.1']
    %19 = vsyncpa [#allocation5], 0
    %s20 = scalar_lea.sflag [#allocation5], 1
    %21 = vsyncpa %s20, 0
    loop: start=0, step=1, limit=6
    $region2: #{tpu_custom_call.1} parent=1 // loop_pre_header
      _
    $region3: #{tpu_custom_call.1} parent=1 // loop_header
      %s23 = sphi 0, %s27
      %p24 = scmp.ge.s32.totalorder %s23, 6
      %s30 = sphi 0, %s42
      %s31 = sphi 0, %s38
      %s32 = sphi 0, %s30
      %s33 = sphi 0, %s31
      %s34 = sphi 0, %s32
      %s35 = sphi 0, %s33
      %s47 = sphi 0, %s49
      %s50 = sphi 0, %s47
      %s51 = sphi 0, %s50
      %s67 = sphi 0, %s51
      %s71 = sphi 0, %s71
      %s73 = sphi 0, %s71
      %s74 = sphi 0, %s73
      %s88 = sphi 0, %s74
      %s94 = sphi 0, %s96
      %s97 = sphi 0, %s94
      %s98 = sphi 0, %s97
      %s114 = sphi 0, %s98
      %s118 = sphi 0, %s118
      %s120 = sphi 0, %s118
      %s121 = sphi 0, %s120
      %s135 = sphi 0, %s121
      %s139 = sphi 0, %s139
      %s141 = sphi 0, %s139
      %s142 = sphi 0, %s141
      %s156 = sphi 0, %s142
    $region4: #{tpu_custom_call.1} parent=1 // loop_header_branch
      %26 = sbr.rel (%p24) target = $region8
    $region5: #{tpu_custom_call.1} parent=1 // loop_body
      %s28 = ssub.s32 %s23, 1
      %s29 = ssub.s32 %s23, 2
      %s36 = sadd.s32 1, %s31
      %p37 = scmp.ge.s32.totalorder %s36, 2
      %s38 = scalar_select %p37, 0, %s36
      %s39 = sadd.s32 1, %s30
      %s40 = scalar_select %p37, %s39, %s30
      %p41 = scmp.ge.s32.totalorder %s40, 2
      %s42 = scalar_select %p41, 0, %s40
      %s43 = ssub.s32 %s31, %s38
      %s44 = ssub.s32 %s30, %s42
      %s45 = sor.u32 %s43, %s44
      %p46 = scmp.eq.s32.totalorder %s45, 0
      %s48 = sadd.s32 %s47, 1
      %s49 = scalar_select %p46, %s47, %s48
      %p52 = pneg %p46
      %p53 = scmp.eq.s32.totalorder %s23, 3
      %p54 = por %p52, %p53
      %p55 = scmp.ne.s32.totalorder %s47, %s50
      %p56 = scmp.eq.s32.totalorder %s23, 0
      %p57 = por %p55, %p56
      %p58 = scmp.ne.s32.totalorder %s47, %s50
      %p59 = scmp.eq.s32.totalorder %s28, 3
      %p60 = por %p58, %p59
      %p61 = scmp.ne.s32.totalorder %s50, %s51
      %p62 = scmp.eq.s32.totalorder %s28, 0
      %p63 = por %p61, %p62
      %p64 = scmp.ne.s32.totalorder %s50, %s51
      %p65 = scmp.eq.s32.totalorder %s29, 3
      %p66 = por %p64, %p65
      %p68 = scmp.ne.s32.totalorder %s51, %s67
      %p69 = scmp.eq.s32.totalorder %s29, 0
      %p70 = por %p68, %p69
      %s72 = sadd.s32 %s71, 1
      %p75 = scmp.eq.s32.totalorder %s23, 3
      %p76 = scmp.ne.s32.totalorder %s71, %s73
      %p77 = scmp.eq.s32.totalorder %s23, 0
      %p78 = por %p76, %p77
      %p79 = scmp.ne.s32.totalorder %s71, %s73
      %p80 = scmp.eq.s32.totalorder %s28, 3
      %p81 = por %p79, %p80
      %p82 = scmp.ne.s32.totalorder %s73, %s74
      %p83 = scmp.eq.s32.totalorder %s28, 0
      %p84 = por %p82, %p83
      %p85 = scmp.ne.s32.totalorder %s73, %s74
      %p86 = scmp.eq.s32.totalorder %s29, 3
      %p87 = por %p85, %p86
      %p89 = scmp.ne.s32.totalorder %s74, %s88
      %p90 = scmp.eq.s32.totalorder %s29, 0
      %p91 = por %p89, %p90
      %s92 = ssub.s32 %s30, %s42
      %p93 = scmp.eq.s32.totalorder %s92, 0
      %s95 = sadd.s32 %s94, 1
      %s96 = scalar_select %p93, %s94, %s95
      %p99 = pneg %p93
      %p100 = scmp.eq.s32.totalorder %s23, 3
      %p101 = por %p99, %p100
      %p102 = scmp.ne.s32.totalorder %s94, %s97
      %p103 = scmp.eq.s32.totalorder %s23, 0
      %p104 = por %p102, %p103
      %p105 = scmp.ne.s32.totalorder %s94, %s97
      %p106 = scmp.eq.s32.totalorder %s28, 3
      %p107 = por %p105, %p106
      %p108 = scmp.ne.s32.totalorder %s97, %s98
      %p109 = scmp.eq.s32.totalorder %s28, 0
      %p110 = por %p108, %p109
      %p111 = scmp.ne.s32.totalorder %s97, %s98
      %p112 = scmp.eq.s32.totalorder %s29, 3
      %p113 = por %p111, %p112
      %p115 = scmp.ne.s32.totalorder %s98, %s114
      %p116 = scmp.eq.s32.totalorder %s29, 0
      %p117 = por %p115, %p116
      %s119 = sadd.s32 %s118, 1
      %p122 = scmp.eq.s32.totalorder %s23, 3
      %p123 = scmp.ne.s32.totalorder %s118, %s120
      %p124 = scmp.eq.s32.totalorder %s23, 0
      %p125 = por %p123, %p124
      %p126 = scmp.ne.s32.totalorder %s118, %s120
      %p127 = scmp.eq.s32.totalorder %s28, 3
      %p128 = por %p126, %p127
      %p129 = scmp.ne.s32.totalorder %s120, %s121
      %p130 = scmp.eq.s32.totalorder %s28, 0
      %p131 = por %p129, %p130
      %p132 = scmp.ne.s32.totalorder %s120, %s121
      %p133 = scmp.eq.s32.totalorder %s29, 3
      %p134 = por %p132, %p133
      %p136 = scmp.ne.s32.totalorder %s121, %s135
      %p137 = scmp.eq.s32.totalorder %s29, 0
      %p138 = por %p136, %p137
      %s140 = sadd.s32 %s139, 1
      %p143 = scmp.eq.s32.totalorder %s23, 3
      %p144 = scmp.ne.s32.totalorder %s139, %s141
      %p145 = scmp.eq.s32.totalorder %s23, 0
      %p146 = por %p144, %p145
      %p147 = scmp.ne.s32.totalorder %s139, %s141
      %p148 = scmp.eq.s32.totalorder %s28, 3
      %p149 = por %p147, %p148
      %p150 = scmp.ne.s32.totalorder %s141, %s142
      %p151 = scmp.eq.s32.totalorder %s28, 0
      %p152 = por %p150, %p151
      %p153 = scmp.ne.s32.totalorder %s141, %s142
      %p154 = scmp.eq.s32.totalorder %s29, 3
      %p155 = por %p153, %p154
      %p157 = scmp.ne.s32.totalorder %s142, %s156
      %p158 = scmp.eq.s32.totalorder %s29, 0
      %p159 = por %p157, %p158
      %p160 = scmp.le.s32.totalorder 1, %s23
      %p161 = scmp.lt.s32.totalorder %s23, 5
      %p162 = pnand %p160, %p161
      %p163 = pneg %p162
      // Predicated region
      $region9: #{tpu_custom_call.1} parent=5 // pred_check
        _
      $region10: #{tpu_custom_call.1} parent=5 // pred_check_branch
        %165 = sbr.rel (%p162) target = $region12
      $region11: #{tpu_custom_call.1} parent=5 // pred_region
        %s166 = ssub.s32 %s23, 1
        // Predicated region
        $region13: #{tpu_custom_call.1} parent=11 // pred_check
          %p167 = pneg %p84
        $region14: #{tpu_custom_call.1} parent=11 // pred_check_branch
          %169 = sbr.rel (%p167) target = $region16
        $region15: #{tpu_custom_call.1} parent=11 // pred_region
          _
        $region16: #{tpu_custom_call.1} parent=11 // pred_fallthru
          _
      $region12: #{tpu_custom_call.1} parent=5 // pred_fallthru
        _
      %p170 = scmp.lt.s32.totalorder %s23, 4
      // Predicated region
      $region17: #{tpu_custom_call.1} parent=5 // pred_check
        %p171 = pneg %p170
      $region18: #{tpu_custom_call.1} parent=5 // pred_check_branch
        %173 = sbr.rel (%p171) target = $region20
      $region19: #{tpu_custom_call.1} parent=5 // pred_region
        // Predicated region
        $region21: #{tpu_custom_call.1} parent=19 // pred_check
          %p174 = pneg %p57
        $region22: #{tpu_custom_call.1} parent=19 // pred_check_branch
          %176 = sbr.rel (%p174) target = $region24
        $region23: #{tpu_custom_call.1} parent=19 // pred_region
          %s177 = sand.u32 %s47, 1
          %s178 = scalar_lea.sflag [#allocation5], %s177
          %s179 = sand.u32 %s47, 1
          %s180 = smul.addr %s179, 4
          %s181 = scalar_lea.vmem [#allocation4], %s180
          %183 = vsyncadd %s178, 0
          %s184 = smul.addr %s31, 2
          %s185 = sadd.s32 %s30, %s184
          %s186 = smul.addr %s185, 4
          %s187 = scalar_lea.hbm %s1, %s186
          %s189 = sshll.u32 %s187, 4
          %s190 = int_to_ptr.hbm [resolvable:$true] %s189
          %s191 = sshll.u32 %s181, 4
          %s192 = int_to_ptr.vmem [resolvable:$true] %s191
          %194 = dma.hbm_to_vmem [thread:$0]  %s190, 64, %s192, %s178
        $region24: #{tpu_custom_call.1} parent=19 // pred_fallthru
          _
        // Predicated region
        $region25: #{tpu_custom_call.1} parent=19 // pred_check
          %p195 = pneg %p104
        $region26: #{tpu_custom_call.1} parent=19 // pred_check_branch
          %197 = sbr.rel (%p195) target = $region28
        $region27: #{tpu_custom_call.1} parent=19 // pred_region
          %p198 = scmp.lt.s32.totalorder %s30, 1
          %s199 = scalar_select %p198, %s30, 1
          %s200 = scalar_lea.vmem %s3, %s199
        $region28: #{tpu_custom_call.1} parent=19 // pred_fallthru
          _
      $region20: #{tpu_custom_call.1} parent=5 // pred_fallthru
        _
      %p201 = scmp.le.s32.totalorder 1, %s23
      %p202 = scmp.lt.s32.totalorder %s23, 5
      %p203 = pnand %p201, %p202
      %p204 = pneg %p203
      // Predicated region
      $region29: #{tpu_custom_call.1} parent=5 // pred_check
        _
      $region30: #{tpu_custom_call.1} parent=5 // pred_check_branch
        %206 = sbr.rel (%p203) target = $region32
      $region31: #{tpu_custom_call.1} parent=5 // pred_region
        %s207 = ssub.s32 %s23, 1
        %s208 = sand.u32 %s50, 1
        %s209 = scalar_lea.sflag [#allocation5], %s208
        %s210 = sand.u32 %s50, 1
        %s211 = smul.addr %s210, 4
        %s212 = scalar_lea.vmem [#allocation4], %s211
        // Predicated region
        $region33: #{tpu_custom_call.1} parent=31 // pred_check
          %p213 = pneg %p63
        $region34: #{tpu_custom_call.1} parent=31 // pred_check_branch
          %215 = sbr.rel (%p213) target = $region36
        $region35: #{tpu_custom_call.1} parent=31 // pred_region
          %217 = dma.done %s209, 64
        $region36: #{tpu_custom_call.1} parent=31 // pred_fallthru
          _
        %s218 = sand.u32 %s50, 1
        %s219 = scalar_lea.sflag [#allocation5], %s218
        %s220 = sand.u32 %s50, 1
        %s221 = smul.addr %s220, 4
        %s222 = scalar_lea.vmem [#allocation4], %s221
        %p223 = pneg %p63
        %p224 = pneg %p60
        %p225 = pneg %p84
        %p226 = pneg %p81
        %p227 = scmp.lt.s32.totalorder %s32, 1
        %s228 = scalar_select %p227, %s32, 1
        %s229 = scalar_lea.vmem %s3, %s228
        %p230 = pneg %p110
        %p231 = pneg %p107
        %p232 = pneg %p131
        %p233 = pneg %p128
        %p234 = pneg %p152
        %p235 = pneg %p149
        %p236 = scmp.lt.s32.totalorder %s32, 1
        %s237 = scalar_select %p236, %s32, 1
        %s238 = scalar_lea.vmem %s3, %s237
        %p240 = scmp.eq.s32.totalorder %s32, 0
        %p241 = scmp.eq.s32.totalorder %s33, 0
        %p242 = pnand %p240, %p241
        %p243 = pneg %p242
        // Predicated region
        $region37: #{tpu_custom_call.1} parent=31 // pred_check
          _
        $region38: #{tpu_custom_call.1} parent=31 // pred_check_branch
          %245 = sbr.rel (%p242) target = $region40
        $region39: #{tpu_custom_call.1} parent=31 // pred_region
          %vm246 = vcmask 7168
          %247 = vst.msk [vmem:[%s4] sm:$0xff] %vm246, 0.0
          %248 = vst.msk [vmem:[%s4 + $0x8] sm:$0xff] %vm246, 0.0
          %249 = vst.msk [vmem:[%s5] sm:$0xff] %vm246, 0.0
          %250 = vst.msk [vmem:[%s5 + $0x8] sm:$0xff] %vm246, 0.0
        $region40: #{tpu_custom_call.1} parent=31 // pred_fallthru
          _
        %v251 = vld [vmem:[%s2] sm:$0xf]
        %v252 = vld [vmem:[%s2 + $0x4] sm:$0xf]
        %v253 = vld [vmem:[%s212] sm:$0xf]
        %v256 = vunpack.c.l.b16 %v251
        %v257 = vunpack.c.l.b16 %v252
        %v258 = vpack.c.b16 %v257, %v256
        %vm259 = vcmask 64512
        %v261 = vsel %vm259, %v258, 0
        %vm263 = vcmask 1043456
        %v265 = vsel %vm263, %v253, 0
        %267 = vmatpush.bf16.msra.mxu0 0
        %268 = vmatpush.bf16.msra.mxu0 0
        %269 = vmatpush.bf16.msra.mxu0 0
        %270 = vmatpush.bf16.msra.mxu0 0
        %271 = vmatpush.bf16.msra.mxu0 0
        %272 = vmatpush.bf16.msra.mxu0 0
        %273 = vmatpush.bf16.msra.mxu0 0
        %274 = vmatpush.bf16.msra.mxu0 %v265
        %275 = vmatmul.bf16.gmra.mxu0 %v261
        %v276 = vpop.f32.mrf.mxu0
        %v277 = vadd.f32 0.0, %v276
        %v278 = vpop.f32.mrf.mxu0
        %v279 = vadd.f32 0.0, %v278
        %280 = vdwg.mxu0
        %v281 = vld [vmem:[%s238] sm:$0x1]
        %s282 = sld [smem:[#allocation3 + %s33]]
        %v283 = vstv %s282
        %vm284 = vcmp.lt.s32.totalorder %v281, %v283
        %v285 = vsel %vm284, 1, 0
        %v286 = vperm.slane %v285, 0
        %vm287 = vcmp.eq.s32.totalorder %v286, 1
        %v288 = vsel %vm287, %v277, 0.0
        %v289 = vsel %vm287, %v279, 0.0
        %v290 = vld [vmem:[%s4] sm:$0xff]
        %v291 = vld [vmem:[%s4 + $0x8] sm:$0xff]
        %292 = vadd.xlane.f32.xlu0 %v288
        %v293 = vpop.xlane.xlu0 %292
        %294 = vadd.xlane.f32.xlu0 %v289
        %v295 = vpop.xlane.xlu0 %294
        %v296 = vadd.f32 %v290, %v293
        %v297 = vadd.f32 %v291, %v295
        %vm298 = vcmask 7168
        %299 = vst.msk [vmem:[%s4] sm:$0xff] %vm298, %v296
        %300 = vst.msk [vmem:[%s4 + $0x8] sm:$0xff] %vm298, %v297
        %v301 = vld [vmem:[%s5] sm:$0xff]
        %v302 = vld [vmem:[%s5 + $0x8] sm:$0xff]
        %v303 = vmul.f32 %v288, %v288
        %v304 = vmul.f32 %v289, %v289
        %305 = vadd.xlane.f32.xlu0 %v303
        %v306 = vpop.xlane.xlu0 %305
        %307 = vadd.xlane.f32.xlu0 %v304
        %v308 = vpop.xlane.xlu0 %307
        %v309 = vadd.f32 %v301, %v306
        %v310 = vadd.f32 %v302, %v308
        %311 = vst.msk [vmem:[%s5] sm:$0xff] %vm298, %v309
        %312 = vst.msk [vmem:[%s5 + $0x8] sm:$0xff] %vm298, %v310
        // Predicated region
        $region41: #{tpu_custom_call.1} parent=31 // pred_check
          %p313 = pneg %p128
        $region42: #{tpu_custom_call.1} parent=31 // pred_check_branch
          %315 = sbr.rel (%p313) target = $region44
        $region43: #{tpu_custom_call.1} parent=31 // pred_region
          _
        $region44: #{tpu_custom_call.1} parent=31 // pred_fallthru
          _
        // Predicated region
        $region45: #{tpu_custom_call.1} parent=31 // pred_check
          %p316 = pneg %p149
        $region46: #{tpu_custom_call.1} parent=31 // pred_check_branch
          %318 = sbr.rel (%p316) target = $region48
        $region47: #{tpu_custom_call.1} parent=31 // pred_region
          _
        $region48: #{tpu_custom_call.1} parent=31 // pred_fallthru
          _
        // Predicated region
        $region49: #{tpu_custom_call.1} parent=31 // pred_check
          %p319 = pneg %p128
        $region50: #{tpu_custom_call.1} parent=31 // pred_check_branch
          %321 = sbr.rel (%p319) target = $region52
        $region51: #{tpu_custom_call.1} parent=31 // pred_region
          _
        $region52: #{tpu_custom_call.1} parent=31 // pred_fallthru
          _
        // Predicated region
        $region53: #{tpu_custom_call.1} parent=31 // pred_check
          %p322 = pneg %p149
        $region54: #{tpu_custom_call.1} parent=31 // pred_check_branch
          %324 = sbr.rel (%p322) target = $region56
        $region55: #{tpu_custom_call.1} parent=31 // pred_region
          _
        $region56: #{tpu_custom_call.1} parent=31 // pred_fallthru
          _
      $region32: #{tpu_custom_call.1} parent=5 // pred_fallthru
        _
      %p325 = scmp.le.s32.totalorder 2, %s23
      // Predicated region
      $region57: #{tpu_custom_call.1} parent=5 // pred_check
        %p326 = pneg %p325
      $region58: #{tpu_custom_call.1} parent=5 // pred_check_branch
        %328 = sbr.rel (%p326) target = $region60
      $region59: #{tpu_custom_call.1} parent=5 // pred_region
        %s329 = ssub.s32 %s23, 2
      $region60: #{tpu_custom_call.1} parent=5 // pred_fallthru
        _
    $region6: #{tpu_custom_call.1} parent=1 // loop_footer
      %s27 = sadd.s32 1, %s23
    $region7: #{tpu_custom_call.1} parent=1 // loop_footer_branch
      %22 = sbr.rel target = $region3
    $region8: #{tpu_custom_call.1} parent=1 // loop_exit
      _
    %330 = vsyncpa [#allocation5], 1
    %s331 = scalar_lea.sflag [#allocation5], 1
    %332 = vsyncpa %s331, 1

</llo_original>
